<compile_context>
chip_gen: v7x
topology: tpu7x:2x2x1
jax: 0.10.0
libtpu: 0.0.40
codegen_flags: <defaults>
</compile_context>

<pallas_src>
import math

import jax
import jax.numpy as jnp
from jax.experimental import pallas as pl
from jax.experimental.pallas import tpu as pltpu

_LANE = 128
_SUBLANE = 8


def _round_up(x, m):
    return ((x + m - 1) // m) * m


def _leaky_relu(x, slope=0.1):
    return jnp.where(x >= 0, x, slope * x)


def _fnet_kernel(z_ref, w1_ref, b1_ref, w2_ref, b2_ref, w3_ref, b3_ref, o_ref):
    """Whole 3-layer MLP per batch tile: three MXU matmuls + VPU activations.

    z_ref:  (bt, z_dim)        w1_ref: (z_dim, P)   b1_ref: (1, P)
    w2_ref: (P, P)             b2_ref: (1, P)
    w3_ref: (P, z_dim)         b3_ref: (1, z_dim)   o_ref:  (bt, z_dim)
    """
    wdt = w1_ref.dtype  # f32 or bf16 (MXU input dtype); accumulation is f32.

    z = z_ref[...]
    h = jnp.dot(z.astype(wdt), w1_ref[...],
                preferred_element_type=jnp.float32) + b1_ref[...]
    h = _leaky_relu(h)

    h = jnp.dot(h.astype(wdt), w2_ref[...],
                preferred_element_type=jnp.float32) + b2_ref[...]
    h = _leaky_relu(h)

    out = jnp.dot(h.astype(wdt), w3_ref[...],
                  preferred_element_type=jnp.float32) + b3_ref[...]
    o_ref[...] = out.astype(o_ref.dtype)


def init_f_net_params(key, z_dim, latent_dim):
    """PyTorch nn.Linear default init: U(-1/sqrt(fan_in), 1/sqrt(fan_in))."""
    keys = jax.random.split(key, 6)

    def linear(kw, kb, fan_in, fan_out):
        bound = 1.0 / math.sqrt(fan_in)
        w = jax.random.uniform(kw, (fan_in, fan_out), jnp.float32, -bound, bound)
        b = jax.random.uniform(kb, (1, fan_out), jnp.float32, -bound, bound)
        return w, b

    w1, b1 = linear(keys[0], keys[1], z_dim, latent_dim)
    w2, b2 = linear(keys[2], keys[3], latent_dim, latent_dim)
    w3, b3 = linear(keys[4], keys[5], latent_dim, z_dim)
    return {"w1": w1, "b1": b1, "w2": w2, "b2": b2, "w3": w3, "b3": b3}


def prepare_f_net_params(params, *, use_bf16=False):
    """One-time (hoisted) padding of the latent dim to a lane multiple.

    Only the latent (50 -> 128) dim is padded; z_dim stays un-padded so the
    per-call z/out HBM streams are not inflated.  Padded weight columns/rows
    and bias lanes are exactly zero, so results are unchanged.
    """
    w1, b1 = params["w1"], params["b1"]
    w2, b2 = params["w2"], params["b2"]
    w3, b3 = params["w3"], params["b3"]
    z_dim, latent = w1.shape
    P = _round_up(latent, _LANE)
    pad = P - latent
    wdt = jnp.bfloat16 if use_bf16 else jnp.float32

    return {
        "w1": jnp.pad(w1, ((0, 0), (0, pad))).astype(wdt),      # (z_dim, P)
        "b1": jnp.pad(b1, ((0, 0), (0, pad))),                  # (1, P) f32
        "w2": jnp.pad(w2, ((0, pad), (0, pad))).astype(wdt),    # (P, P)
        "b2": jnp.pad(b2, ((0, 0), (0, pad))),                  # (1, P) f32
        "w3": jnp.pad(w3, ((0, pad), (0, 0))).astype(wdt),      # (P, z_dim)
        "b3": b3,                                               # (1, z_dim) f32
    }


def f_net_forward(z, padded_params, *, batch_tile=None):
    """F_net forward pass. z: (B, z_dim) f32; padded_params from
    prepare_f_net_params (weights are VMEM-resident across the batch grid)."""
    w1, b1 = padded_params["w1"], padded_params["b1"]
    w2, b2 = padded_params["w2"], padded_params["b2"]
    w3, b3 = padded_params["w3"], padded_params["b3"]

    B, z_dim = z.shape
    assert w1.shape[0] == z_dim
    P = w1.shape[1]

    # Batch tiling: >= 4 grid steps when possible (2 per v7x TensorCore, and
    # double-buffered z/out DMA within each core), capped at 2048 rows.
    # With un-padded (z_dim-wide) streams VMEM stays tiny on v5e/v6e/v7x.
    if batch_tile is None:
        batch_tile = min(2048, max(_SUBLANE, _round_up(pl.cdiv(B, 4), _SUBLANE)))
    batch_tile = max(_SUBLANE, _round_up(batch_tile, _SUBLANE))
    Bp = _round_up(B, batch_tile)
    if Bp != B:
        z = jnp.pad(z, ((0, Bp - B), (0, 0)))
    grid = (Bp // batch_tile,)

    w_bytes = (w1.size * w1.dtype.itemsize + w2.size * w2.dtype.itemsize
               + w3.size * w3.dtype.itemsize)
    b_bytes = 4 * (b1.size + b2.size + b3.size)
    cost = pl.CostEstimate(
        flops=2 * Bp * (z_dim * P + P * P + P * z_dim),
        transcendentals=0,
        bytes_accessed=4 * Bp * z_dim * 2 + w_bytes + b_bytes,
    )

    out = pl.pallas_call(
        _fnet_kernel,
        out_shape=jax.ShapeDtypeStruct((Bp, z_dim), z.dtype),
        grid_spec=pltpu.PrefetchScalarGridSpec(
            num_scalar_prefetch=0,
            grid=grid,
            in_specs=[
                pl.BlockSpec((batch_tile, z_dim), lambda i: (i, 0)),  # z tile
                pl.BlockSpec((z_dim, P), lambda i: (0, 0)),           # W1 (resident)
                pl.BlockSpec((1, P), lambda i: (0, 0)),               # b1
                pl.BlockSpec((P, P), lambda i: (0, 0)),               # W2
                pl.BlockSpec((1, P), lambda i: (0, 0)),               # b2
                pl.BlockSpec((P, z_dim), lambda i: (0, 0)),           # W3
                pl.BlockSpec((1, z_dim), lambda i: (0, 0)),           # b3
            ],
            out_specs=pl.BlockSpec((batch_tile, z_dim), lambda i: (i, 0)),
        ),
        compiler_params=pltpu.CompilerParams(
            dimension_semantics=("parallel",),
        ),
        cost_estimate=cost,
    )(z, w1, b1, w2, b2, w3, b3)

    return out[:B] if Bp != B else out


def f_net_reference(z, params):
    """Pure-JAX f32 reference for correctness checking."""
    h = jnp.dot(z, params["w1"]) + params["b1"]
    h = jnp.where(h >= 0, h, 0.1 * h)
    h = jnp.dot(h, params["w2"]) + params["b2"]
    h = jnp.where(h >= 0, h, 0.1 * h)
    return jnp.dot(h, params["w3"]) + params["b3"]


if __name__ == "__main__":
    # Diabetes-lasso sizes: z_dim = 11 features, latent = 50.
    z_dim = 11
    latent_dim = 50
    batch = 256

    key = jax.random.PRNGKey(0)
    k_params, k_z = jax.random.split(key)

    params = init_f_net_params(k_params, z_dim, latent_dim)
    z = jax.random.normal(k_z, (batch, z_dim), jnp.float32)

    ref = f_net_reference(z, params)

    # f32 path: bit-close to the reference.
    padded_f32 = prepare_f_net_params(params, use_bf16=False)
    out = jax.block_until_ready(f_net_forward(z, padded_f32))
    assert out.shape == (batch, z_dim)
    assert jnp.allclose(out, ref, atol=1e-5, rtol=1e-5), "f32 mismatch vs reference"

    # bf16-MXU path (f32 accumulation): faster on v6e/v7x, looser tolerance.
    padded_bf16 = prepare_f_net_params(params, use_bf16=True)
    out_bf16 = jax.block_until_ready(f_net_forward(z, padded_bf16))
    assert out_bf16.shape == (batch, z_dim)
    assert jnp.allclose(out_bf16, ref, atol=1e-1, rtol=1e-1), "bf16 mismatch vs reference"

    print("KERNEL_OK")
</pallas_src>

<mosaic_0001>
module attributes {stable_mosaic.version = 11 : i64} {
  func.func @_fnet_kernel(%arg0: i32, %arg1: memref<64x11xf32, #tpu.memory_space<vmem>>, %arg2: memref<11x128xf32, #tpu.memory_space<vmem>>, %arg3: memref<1x128xf32, #tpu.memory_space<vmem>>, %arg4: memref<128x128xf32, #tpu.memory_space<vmem>>, %arg5: memref<1x128xf32, #tpu.memory_space<vmem>>, %arg6: memref<128x11xf32, #tpu.memory_space<vmem>>, %arg7: memref<1x11xf32, #tpu.memory_space<vmem>>, %arg8: memref<64x11xf32, #tpu.memory_space<vmem>>) attributes {dimension_semantics = [#tpu.dimension_semantics<parallel>], iteration_bounds = array<i64: 4>, scalar_prefetch = 0 : i64, scratch_operands = 0 : i64, tpu.core_type = #tpu.core_type<tc>, window_params = [{transform_indices = @transform_0, window_bounds = array<i64: 64, 11>}, {pipeline_mode = #tpu.pipeline_mode<synchronous>, transform_indices = @transform_1, window_bounds = array<i64: 11, 128>}, {pipeline_mode = #tpu.pipeline_mode<synchronous>, transform_indices = @transform_2, window_bounds = array<i64: 1, 128>}, {pipeline_mode = #tpu.pipeline_mode<synchronous>, transform_indices = @transform_3, window_bounds = array<i64: 128, 128>}, {pipeline_mode = #tpu.pipeline_mode<synchronous>, transform_indices = @transform_4, window_bounds = array<i64: 1, 128>}, {pipeline_mode = #tpu.pipeline_mode<synchronous>, transform_indices = @transform_5, window_bounds = array<i64: 128, 11>}, {pipeline_mode = #tpu.pipeline_mode<synchronous>, transform_indices = @transform_6, window_bounds = array<i64: 1, 11>}, {transform_indices = @transform_7, window_bounds = array<i64: 64, 11>}]} {
    %c0 = arith.constant 0 : index
    %c0_0 = arith.constant 0 : index
    %0 = vector.load %arg1[%c0, %c0_0] : memref<64x11xf32, #tpu.memory_space<vmem>>, vector<64x11xf32>
    %c0_1 = arith.constant 0 : index
    %c0_2 = arith.constant 0 : index
    %1 = vector.load %arg2[%c0_1, %c0_2] : memref<11x128xf32, #tpu.memory_space<vmem>>, vector<11x128xf32>
    %cst = arith.constant dense<0.000000e+00> : vector<64x128xf32>
    %2 = tpu.matmul %0, %1, %cst {dimension_numbers = #tpu.dot_dimension_numbers<[1], [0], [0], [1], [0, 0, 1, 1], [], []>} : vector<64x11xf32>, vector<11x128xf32>, vector<64x128xf32> -> vector<64x128xf32>
    %c0_3 = arith.constant 0 : index
    %c0_4 = arith.constant 0 : index
    %3 = vector.load %arg3[%c0_3, %c0_4] : memref<1x128xf32, #tpu.memory_space<vmem>>, vector<1x128xf32>
    %4 = vector.broadcast %3 : vector<1x128xf32> to vector<64x128xf32>
    %5 = arith.addf %2, %4 : vector<64x128xf32>
    %cst_5 = arith.constant 0.000000e+00 : f32
    %6 = vector.broadcast %cst_5 : f32 to vector<64x128xf32>
    %7 = arith.cmpf oge, %5, %6 : vector<64x128xf32>
    %cst_6 = arith.constant 1.000000e-01 : f32
    %8 = vector.broadcast %cst_6 : f32 to vector<64x128xf32>
    %9 = arith.mulf %8, %5 : vector<64x128xf32>
    %10 = arith.select %7, %5, %9 : vector<64x128xi1>, vector<64x128xf32>
    %c0_7 = arith.constant 0 : index
    %c0_8 = arith.constant 0 : index
    %11 = vector.load %arg4[%c0_7, %c0_8] : memref<128x128xf32, #tpu.memory_space<vmem>>, vector<128x128xf32>
    %cst_9 = arith.constant dense<0.000000e+00> : vector<64x128xf32>
    %12 = tpu.matmul %10, %11, %cst_9 {dimension_numbers = #tpu.dot_dimension_numbers<[1], [0], [0], [1], [0, 0, 1, 1], [], []>} : vector<64x128xf32>, vector<128x128xf32>, vector<64x128xf32> -> vector<64x128xf32>
    %c0_10 = arith.constant 0 : index
    %c0_11 = arith.constant 0 : index
    %13 = vector.load %arg5[%c0_10, %c0_11] : memref<1x128xf32, #tpu.memory_space<vmem>>, vector<1x128xf32>
    %14 = vector.broadcast %13 : vector<1x128xf32> to vector<64x128xf32>
    %15 = arith.addf %12, %14 : vector<64x128xf32>
    %cst_12 = arith.constant 0.000000e+00 : f32
    %16 = vector.broadcast %cst_12 : f32 to vector<64x128xf32>
    %17 = arith.cmpf oge, %15, %16 : vector<64x128xf32>
    %cst_13 = arith.constant 1.000000e-01 : f32
    %18 = vector.broadcast %cst_13 : f32 to vector<64x128xf32>
    %19 = arith.mulf %18, %15 : vector<64x128xf32>
    %20 = arith.select %17, %15, %19 : vector<64x128xi1>, vector<64x128xf32>
    %c0_14 = arith.constant 0 : index
    %c0_15 = arith.constant 0 : index
    %21 = vector.load %arg6[%c0_14, %c0_15] : memref<128x11xf32, #tpu.memory_space<vmem>>, vector<128x11xf32>
    %cst_16 = arith.constant dense<0.000000e+00> : vector<64x11xf32>
    %22 = tpu.matmul %20, %21, %cst_16 {dimension_numbers = #tpu.dot_dimension_numbers<[1], [0], [0], [1], [0, 0, 1, 1], [], []>} : vector<64x128xf32>, vector<128x11xf32>, vector<64x11xf32> -> vector<64x11xf32>
    %c0_17 = arith.constant 0 : index
    %c0_18 = arith.constant 0 : index
    %23 = vector.load %arg7[%c0_17, %c0_18] : memref<1x11xf32, #tpu.memory_space<vmem>>, vector<1x11xf32>
    %24 = vector.broadcast %23 : vector<1x11xf32> to vector<64x11xf32>
    %25 = arith.addf %22, %24 : vector<64x11xf32>
    %c0_19 = arith.constant 0 : index
    %c0_20 = arith.constant 0 : index
    %26 = vector.load %arg8[%c0_19, %c0_20] : memref<64x11xf32, #tpu.memory_space<vmem>>, vector<64x11xf32>
    tpu.vector_store %arg8[%c0_19, %c0_20], %25 {strides = array<i32>} : memref<64x11xf32, #tpu.memory_space<vmem>>, vector<64x11xf32>,
    return
  }
  func.func @transform_0(%arg0: i32) -> (i32, i32) {
    %c0_i32 = arith.constant 0 : i32
    %c0_i32_0 = arith.constant 0 : i32
    return %arg0, %c0_i32 : i32, i32
  }
  func.func @transform_1(%arg0: i32) -> (i32, i32) {
    %c0_i32 = arith.constant 0 : i32
    %c0_i32_0 = arith.constant 0 : i32
    %c0_i32_1 = arith.constant 0 : i32
    return %c0_i32, %c0_i32_0 : i32, i32
  }
  func.func @transform_2(%arg0: i32) -> (i32, i32) {
    %c0_i32 = arith.constant 0 : i32
    %c0_i32_0 = arith.constant 0 : i32
    %c0_i32_1 = arith.constant 0 : i32
    return %c0_i32, %c0_i32_0 : i32, i32
  }
  func.func @transform_3(%arg0: i32) -> (i32, i32) {
    %c0_i32 = arith.constant 0 : i32
    %c0_i32_0 = arith.constant 0 : i32
    %c0_i32_1 = arith.constant 0 : i32
    return %c0_i32, %c0_i32_0 : i32, i32
  }
  func.func @transform_4(%arg0: i32) -> (i32, i32) {
    %c0_i32 = arith.constant 0 : i32
    %c0_i32_0 = arith.constant 0 : i32
    %c0_i32_1 = arith.constant 0 : i32
    return %c0_i32, %c0_i32_0 : i32, i32
  }
  func.func @transform_5(%arg0: i32) -> (i32, i32) {
    %c0_i32 = arith.constant 0 : i32
    %c0_i32_0 = arith.constant 0 : i32
    %c0_i32_1 = arith.constant 0 : i32
    return %c0_i32, %c0_i32_0 : i32, i32
  }
  func.func @transform_6(%arg0: i32) -> (i32, i32) {
    %c0_i32 = arith.constant 0 : i32
    %c0_i32_0 = arith.constant 0 : i32
    %c0_i32_1 = arith.constant 0 : i32
    return %c0_i32, %c0_i32_0 : i32, i32
  }
  func.func @transform_7(%arg0: i32) -> (i32, i32) {
    %c0_i32 = arith.constant 0 : i32
    %c0_i32_0 = arith.constant 0 : i32
    return %arg0, %c0_i32 : i32, i32
  }
}

</mosaic_0001>

<llo_original>
// kernel: tpu_custom_call.1
$region0: #{tpu_custom_call.1}
  #allocation0 [shape = 'u32[]', space=smem, size = 0x4, offset = 0x4, fixed_abs, tag = 'smem constant byte address 0x4 - core index']
  #allocation1 [shape = 'u32[144,128]{1,0:T(1,128)}', space=vmem, size = 0x12000, scoped, tag = 'internal scratch']
  %s0 = inlined_call_operand.vmem [shape: f32[256,11], index: 0, kind: input, shape index: {}]
  %s1 = inlined_call_operand.vmem [shape: f32[11,128], index: 1, kind: input, shape index: {}]
  %s2 = inlined_call_operand.vmem [shape: f32[1,128], index: 2, kind: input, shape index: {}]
  %s3 = inlined_call_operand.vmem [shape: f32[128,128], index: 3, kind: input, shape index: {}]
  %s4 = inlined_call_operand.vmem [shape: f32[1,128], index: 4, kind: input, shape index: {}]
  %s5 = inlined_call_operand.vmem [shape: f32[128,11], index: 5, kind: input, shape index: {}]
  %s6 = inlined_call_operand.vmem [shape: f32[1,11], index: 6, kind: input, shape index: {}]
  %s7 = inlined_call_operand.vmem [shape: f32[256,11], index: 7, kind: output, shape index: {}]
  %s8 = sld [smem:[#allocation0]]
  $region61: #{tpu_custom_call.1} parent=0
    _
  %s10 = ssub.s32 1, %s8
  %s11 = scalar_select 0, %s10, %s8
  loop: start=0, step=1, limit=6
  $region2: #{tpu_custom_call.1} parent=0 // loop_pre_header
    _
  $region3: #{tpu_custom_call.1} parent=0 // loop_header
    %s13 = sphi 0, %s17
    %p14 = scmp.ge.s32.totalorder %s13, 6
    %s23 = sphi 0, %s25
    %s26 = sphi 0, %s23
    %s27 = sphi 0, %s26
    %s43 = sphi 0, %s27
    %s47 = sphi 0, %s47
    %s49 = sphi 0, %s47
    %s50 = sphi 0, %s49
    %s64 = sphi 0, %s50
    %s68 = sphi 0, %s68
    %s70 = sphi 0, %s68
    %s71 = sphi 0, %s70
    %s85 = sphi 0, %s71
    %s89 = sphi 0, %s89
    %s91 = sphi 0, %s89
    %s92 = sphi 0, %s91
    %s106 = sphi 0, %s92
    %s110 = sphi 0, %s110
    %s112 = sphi 0, %s110
    %s113 = sphi 0, %s112
    %s127 = sphi 0, %s113
    %s131 = sphi 0, %s131
    %s133 = sphi 0, %s131
    %s134 = sphi 0, %s133
    %s148 = sphi 0, %s134
    %s152 = sphi 0, %s152
    %s154 = sphi 0, %s152
    %s155 = sphi 0, %s154
    %s169 = sphi 0, %s155
    %s175 = sphi 0, %s177
    %s178 = sphi 0, %s175
    %s179 = sphi 0, %s178
    %s195 = sphi 0, %s179
  $region4: #{tpu_custom_call.1} parent=0 // loop_header_branch
    %16 = sbr.rel (%p14) target = $region8
  $region5: #{tpu_custom_call.1} parent=0 // loop_body
    %s18 = ssub.s32 %s13, 1
    %s19 = ssub.s32 %s13, 2
    %s20 = sadd.s32 %s13, 1
    %s21 = ssub.s32 %s13, %s20
    %p22 = scmp.eq.s32.totalorder %s21, 0
    %s24 = sadd.s32 %s23, 1
    %s25 = scalar_select %p22, %s23, %s24
    %p28 = pneg %p22
    %p29 = scmp.eq.s32.totalorder %s13, 3
    %p30 = por %p28, %p29
    %p31 = scmp.ne.s32.totalorder %s23, %s26
    %p32 = scmp.eq.s32.totalorder %s13, 0
    %p33 = por %p31, %p32
    %p34 = scmp.ne.s32.totalorder %s23, %s26
    %p35 = scmp.eq.s32.totalorder %s18, 3
    %p36 = por %p34, %p35
    %p37 = scmp.ne.s32.totalorder %s26, %s27
    %p38 = scmp.eq.s32.totalorder %s18, 0
    %p39 = por %p37, %p38
    %p40 = scmp.ne.s32.totalorder %s26, %s27
    %p41 = scmp.eq.s32.totalorder %s19, 3
    %p42 = por %p40, %p41
    %p44 = scmp.ne.s32.totalorder %s27, %s43
    %p45 = scmp.eq.s32.totalorder %s19, 0
    %p46 = por %p44, %p45
    %s48 = sadd.s32 %s47, 1
    %p51 = scmp.eq.s32.totalorder %s13, 3
    %p52 = scmp.ne.s32.totalorder %s47, %s49
    %p53 = scmp.eq.s32.totalorder %s13, 0
    %p54 = por %p52, %p53
    %p55 = scmp.ne.s32.totalorder %s47, %s49
    %p56 = scmp.eq.s32.totalorder %s18, 3
    %p57 = por %p55, %p56
    %p58 = scmp.ne.s32.totalorder %s49, %s50
    %p59 = scmp.eq.s32.totalorder %s18, 0
    %p60 = por %p58, %p59
    %p61 = scmp.ne.s32.totalorder %s49, %s50
    %p62 = scmp.eq.s32.totalorder %s19, 3
    %p63 = por %p61, %p62
    %p65 = scmp.ne.s32.totalorder %s50, %s64
    %p66 = scmp.eq.s32.totalorder %s19, 0
    %p67 = por %p65, %p66
    %s69 = sadd.s32 %s68, 1
    %p72 = scmp.eq.s32.totalorder %s13, 3
    %p73 = scmp.ne.s32.totalorder %s68, %s70
    %p74 = scmp.eq.s32.totalorder %s13, 0
    %p75 = por %p73, %p74
    %p76 = scmp.ne.s32.totalorder %s68, %s70
    %p77 = scmp.eq.s32.totalorder %s18, 3
    %p78 = por %p76, %p77
    %p79 = scmp.ne.s32.totalorder %s70, %s71
    %p80 = scmp.eq.s32.totalorder %s18, 0
    %p81 = por %p79, %p80
    %p82 = scmp.ne.s32.totalorder %s70, %s71
    %p83 = scmp.eq.s32.totalorder %s19, 3
    %p84 = por %p82, %p83
    %p86 = scmp.ne.s32.totalorder %s71, %s85
    %p87 = scmp.eq.s32.totalorder %s19, 0
    %p88 = por %p86, %p87
    %s90 = sadd.s32 %s89, 1
    %p93 = scmp.eq.s32.totalorder %s13, 3
    %p94 = scmp.ne.s32.totalorder %s89, %s91
    %p95 = scmp.eq.s32.totalorder %s13, 0
    %p96 = por %p94, %p95
    %p97 = scmp.ne.s32.totalorder %s89, %s91
    %p98 = scmp.eq.s32.totalorder %s18, 3
    %p99 = por %p97, %p98
    %p100 = scmp.ne.s32.totalorder %s91, %s92
    %p101 = scmp.eq.s32.totalorder %s18, 0
    %p102 = por %p100, %p101
    %p103 = scmp.ne.s32.totalorder %s91, %s92
    %p104 = scmp.eq.s32.totalorder %s19, 3
    %p105 = por %p103, %p104
    %p107 = scmp.ne.s32.totalorder %s92, %s106
    %p108 = scmp.eq.s32.totalorder %s19, 0
    %p109 = por %p107, %p108
    %s111 = sadd.s32 %s110, 1
    %p114 = scmp.eq.s32.totalorder %s13, 3
    %p115 = scmp.ne.s32.totalorder %s110, %s112
    %p116 = scmp.eq.s32.totalorder %s13, 0
    %p117 = por %p115, %p116
    %p118 = scmp.ne.s32.totalorder %s110, %s112
    %p119 = scmp.eq.s32.totalorder %s18, 3
    %p120 = por %p118, %p119
    %p121 = scmp.ne.s32.totalorder %s112, %s113
    %p122 = scmp.eq.s32.totalorder %s18, 0
    %p123 = por %p121, %p122
    %p124 = scmp.ne.s32.totalorder %s112, %s113
    %p125 = scmp.eq.s32.totalorder %s19, 3
    %p126 = por %p124, %p125
    %p128 = scmp.ne.s32.totalorder %s113, %s127
    %p129 = scmp.eq.s32.totalorder %s19, 0
    %p130 = por %p128, %p129
    %s132 = sadd.s32 %s131, 1
    %p135 = scmp.eq.s32.totalorder %s13, 3
    %p136 = scmp.ne.s32.totalorder %s131, %s133
    %p137 = scmp.eq.s32.totalorder %s13, 0
    %p138 = por %p136, %p137
    %p139 = scmp.ne.s32.totalorder %s131, %s133
    %p140 = scmp.eq.s32.totalorder %s18, 3
    %p141 = por %p139, %p140
    %p142 = scmp.ne.s32.totalorder %s133, %s134
    %p143 = scmp.eq.s32.totalorder %s18, 0
    %p144 = por %p142, %p143
    %p145 = scmp.ne.s32.totalorder %s133, %s134
    %p146 = scmp.eq.s32.totalorder %s19, 3
    %p147 = por %p145, %p146
    %p149 = scmp.ne.s32.totalorder %s134, %s148
    %p150 = scmp.eq.s32.totalorder %s19, 0
    %p151 = por %p149, %p150
    %s153 = sadd.s32 %s152, 1
    %p156 = scmp.eq.s32.totalorder %s13, 3
    %p157 = scmp.ne.s32.totalorder %s152, %s154
    %p158 = scmp.eq.s32.totalorder %s13, 0
    %p159 = por %p157, %p158
    %p160 = scmp.ne.s32.totalorder %s152, %s154
    %p161 = scmp.eq.s32.totalorder %s18, 3
    %p162 = por %p160, %p161
    %p163 = scmp.ne.s32.totalorder %s154, %s155
    %p164 = scmp.eq.s32.totalorder %s18, 0
    %p165 = por %p163, %p164
    %p166 = scmp.ne.s32.totalorder %s154, %s155
    %p167 = scmp.eq.s32.totalorder %s19, 3
    %p168 = por %p166, %p167
    %p170 = scmp.ne.s32.totalorder %s155, %s169
    %p171 = scmp.eq.s32.totalorder %s19, 0
    %p172 = por %p170, %p171
    %s173 = ssub.s32 %s13, %s20
    %p174 = scmp.eq.s32.totalorder %s173, 0
    %s176 = sadd.s32 %s175, 1
    %s177 = scalar_select %p174, %s175, %s176
    %p180 = pneg %p174
    %p181 = scmp.eq.s32.totalorder %s13, 3
    %p182 = por %p180, %p181
    %p183 = scmp.ne.s32.totalorder %s175, %s178
    %p184 = scmp.eq.s32.totalorder %s13, 0
    %p185 = por %p183, %p184
    %p186 = scmp.ne.s32.totalorder %s175, %s178
    %p187 = scmp.eq.s32.totalorder %s18, 3
    %p188 = por %p186, %p187
    %p189 = scmp.ne.s32.totalorder %s178, %s179
    %p190 = scmp.eq.s32.totalorder %s18, 0
    %p191 = por %p189, %p190
    %p192 = scmp.ne.s32.totalorder %s178, %s179
    %p193 = scmp.eq.s32.totalorder %s19, 3
    %p194 = por %p192, %p193
    %p196 = scmp.ne.s32.totalorder %s179, %s195
    %p197 = scmp.eq.s32.totalorder %s19, 0
    %p198 = por %p196, %p197
    %p199 = scmp.le.s32.totalorder 1, %s13
    %p200 = scmp.lt.s32.totalorder %s13, 5
    %p201 = pnand %p199, %p200
    %p202 = pneg %p201
    // Predicated region
    $region9: #{tpu_custom_call.1} parent=5 // pred_check
      _
    $region10: #{tpu_custom_call.1} parent=5 // pred_check_branch
      %204 = sbr.rel (%p201) target = $region12
    $region11: #{tpu_custom_call.1} parent=5 // pred_region
      %s205 = ssub.s32 %s13, 1
      // Predicated region
      $region13: #{tpu_custom_call.1} parent=11 // pred_check
        %p206 = pneg %p60
      $region14: #{tpu_custom_call.1} parent=11 // pred_check_branch
        %208 = sbr.rel (%p206) target = $region16
      $region15: #{tpu_custom_call.1} parent=11 // pred_region
        _
      $region16: #{tpu_custom_call.1} parent=11 // pred_fallthru
        _
      // Predicated region
      $region17: #{tpu_custom_call.1} parent=11 // pred_check
        %p209 = pneg %p81
      $region18: #{tpu_custom_call.1} parent=11 // pred_check_branch
        %211 = sbr.rel (%p209) target = $region20
      $region19: #{tpu_custom_call.1} parent=11 // pred_region
        _
      $region20: #{tpu_custom_call.1} parent=11 // pred_fallthru
        _
      // Predicated region
      $region21: #{tpu_custom_call.1} parent=11 // pred_check
        %p212 = pneg %p102
      $region22: #{tpu_custom_call.1} parent=11 // pred_check_branch
        %214 = sbr.rel (%p212) target = $region24
      $region23: #{tpu_custom_call.1} parent=11 // pred_region
        _
      $region24: #{tpu_custom_call.1} parent=11 // pred_fallthru
        _
      // Predicated region
      $region25: #{tpu_custom_call.1} parent=11 // pred_check
        %p215 = pneg %p123
      $region26: #{tpu_custom_call.1} parent=11 // pred_check_branch
        %217 = sbr.rel (%p215) target = $region28
      $region27: #{tpu_custom_call.1} parent=11 // pred_region
        _
      $region28: #{tpu_custom_call.1} parent=11 // pred_fallthru
        _
      // Predicated region
      $region29: #{tpu_custom_call.1} parent=11 // pred_check
        %p218 = pneg %p144
      $region30: #{tpu_custom_call.1} parent=11 // pred_check_branch
        %220 = sbr.rel (%p218) target = $region32
      $region31: #{tpu_custom_call.1} parent=11 // pred_region
        _
      $region32: #{tpu_custom_call.1} parent=11 // pred_fallthru
        _
      // Predicated region
      $region33: #{tpu_custom_call.1} parent=11 // pred_check
        %p221 = pneg %p165
      $region34: #{tpu_custom_call.1} parent=11 // pred_check_branch
        %223 = sbr.rel (%p221) target = $region36
      $region35: #{tpu_custom_call.1} parent=11 // pred_region
        _
      $region36: #{tpu_custom_call.1} parent=11 // pred_fallthru
        _
    $region12: #{tpu_custom_call.1} parent=5 // pred_fallthru
      _
    %p224 = scmp.lt.s32.totalorder %s13, 4
    // Predicated region
    $region37: #{tpu_custom_call.1} parent=5 // pred_check
      %p225 = pneg %p224
    $region38: #{tpu_custom_call.1} parent=5 // pred_check_branch
      %227 = sbr.rel (%p225) target = $region40
    $region39: #{tpu_custom_call.1} parent=5 // pred_region
      // Predicated region
      $region41: #{tpu_custom_call.1} parent=39 // pred_check
        %p228 = pneg %p33
      $region42: #{tpu_custom_call.1} parent=39 // pred_check_branch
        %230 = sbr.rel (%p228) target = $region44
      $region43: #{tpu_custom_call.1} parent=39 // pred_region
        %s231 = smul.u32 8, %s13
        %p232 = scmp.lt.s32.totalorder %s231, 31
        %s233 = scalar_select %p232, %s231, 31
        %s234 = smul.addr %s233, 8
        %s235 = scalar_lea.vmem %s0, %s234
        %s236 = smul.u32 8, %s13
      $region44: #{tpu_custom_call.1} parent=39 // pred_fallthru
        _
    $region40: #{tpu_custom_call.1} parent=5 // pred_fallthru
      _
    %p237 = scmp.le.s32.totalorder 1, %s13
    %p238 = scmp.lt.s32.totalorder %s13, 5
    %p239 = pnand %p237, %p238
    %p240 = pneg %p239
    // Predicated region
    $region45: #{tpu_custom_call.1} parent=5 // pred_check
      _
    $region46: #{tpu_custom_call.1} parent=5 // pred_check_branch
      %242 = sbr.rel (%p239) target = $region48
    $region47: #{tpu_custom_call.1} parent=5 // pred_region
      %s243 = ssub.s32 %s13, 1
      %s244 = smul.u32 8, %s18
      %p245 = scmp.lt.s32.totalorder %s244, 31
      %s246 = scalar_select %p245, %s244, 31
      %s247 = smul.addr %s246, 8
      %s248 = scalar_lea.vmem %s0, %s247
      %p249 = pneg %p39
      %p250 = pneg %p36
      %p251 = pneg %p60
      %p252 = pneg %p57
      %p253 = pneg %p81
      %p254 = pneg %p78
      %p255 = pneg %p102
      %p256 = pneg %p99
      %p257 = pneg %p123
      %p258 = pneg %p120
      %p259 = pneg %p144
      %p260 = pneg %p141
      %p261 = pneg %p165
      %p262 = pneg %p162
      %p263 = pneg %p191
      %p264 = pneg %p188
      %s265 = smul.u32 8, %s18
      %p266 = scmp.lt.s32.totalorder %s265, 31
      %s267 = scalar_select %p266, %s265, 31
      %s268 = smul.addr %s267, 8
      %s269 = scalar_lea.vmem %s7, %s268
      %s270 = smul.u32 8, %s18
      %p271 = scmp.lt.s32.totalorder %s270, 31
      %s272 = scalar_select %p271, %s270, 31
      %s273 = smul.addr %s272, 8
      %s274 = scalar_lea.vmem %s0, %s273
      %s275 = smul.u32 8, %s18
      %s276 = smul.u32 8, %s18
      %p277 = scmp.lt.s32.totalorder %s276, 31
      %s278 = scalar_select %p277, %s276, 31
      %s279 = smul.addr %s278, 8
      %s280 = scalar_lea.vmem %s7, %s279
      %s281 = smul.u32 8, %s18
      %v282 = vld [vmem:[%s274] sm:$0xff]
      %v283 = vld [vmem:[%s274 + $0x8] sm:$0xff]
      %v284 = vld [vmem:[%s274 + $0x10] sm:$0xff]
      %v285 = vld [vmem:[%s274 + $0x18] sm:$0xff]
      %v286 = vld [vmem:[%s274 + $0x20] sm:$0xff]
      %v287 = vld [vmem:[%s274 + $0x28] sm:$0xff]
      %v288 = vld [vmem:[%s274 + $0x30] sm:$0xff]
      %v289 = vld [vmem:[%s274 + $0x38] sm:$0xff]
      %v290 = vld [vmem:[%s1] sm:$0xff]
      %v291 = vld [vmem:[%s1 + $0x8] sm:$0x7]
      %v292 = vld [vmem:[%s2] sm:$0x1]
      %v294 = vlaneseq
      %v295 = vshrl.u32 %v294, 7
      %v296 = vsub.s32 0, %v295
      %v297 = vrot.slane %v292, %v296
      %vm299 = vcmask 89088
      %v301 = vsel %vm299, %v282, 0
      %v304 = vsel %vm299, %v283, 0
      %v307 = vsel %vm299, %v284, 0
      %v310 = vsel %vm299, %v285, 0
      %v313 = vsel %vm299, %v286, 0
      %v316 = vsel %vm299, %v287, 0
      %v319 = vsel %vm299, %v288, 0
      %v322 = vsel %vm299, %v289, 0
      %vm324 = vcmask 1042432
      %v326 = vsel %vm324, %v291, 0
      %328 = vmatprep.subr.mxu0 0.0
      %329 = vmatpush1.msra.mxu0 %v290
      %330 = vmatprep.subr.mxu0 0.0
      %331 = vmatpush1.msra.mxu0 %v326
      %332 = vmatprep.subr.mxu0 0.0
      %333 = vmatpush1.msra.mxu0 0.0
      %334 = vmatprep.subr.mxu0 0.0
      %335 = vmatpush1.msra.mxu0 0.0
      %336 = vmatprep.subr.mxu0 0.0
      %337 = vmatpush1.msra.mxu0 0.0
      %338 = vmatprep.subr.mxu0 0.0
      %339 = vmatpush1.msra.mxu0 0.0
      %340 = vmatprep.subr.mxu0 0.0
      %341 = vmatpush1.msra.mxu0 0.0
      %342 = vmatprep.subr.mxu0 0.0
      %343 = vmatpush1.msra.mxu0 0.0
      %344 = vmatprep.subr.mxu0 0.0
      %345 = vmatpush1.msra.mxu0 0.0
      %346 = vmatprep.subr.mxu0 0.0
      %347 = vmatpush1.msra.mxu0 0.0
      %348 = vmatprep.subr.mxu0 0.0
      %349 = vmatpush1.msra.mxu0 0.0
      %350 = vmatprep.subr.mxu0 0.0
      %351 = vmatpush1.msra.mxu0 0.0
      %352 = vmatprep.subr.mxu0 0.0
      %353 = vmatpush1.msra.mxu0 0.0
      %354 = vmatprep.subr.mxu0 0.0
      %355 = vmatpush1.msra.mxu0 0.0
      %356 = vmatprep.subr.mxu0 0.0
      %357 = vmatpush1.msra.mxu0 0.0
      %358 = vmatprep.subr.mxu0 0.0
      %359 = vmatpush1.msra.mxu0 0.0
      %360 = vmatprep.subr.mxu0 0.0
      %361 = vmatpush1.msra.mxu0 0.0
      %362 = vmatprep.subr.mxu0 0.0
      %363 = vmatpush1.msra.mxu0 0.0
      %364 = vmatprep.subr.mxu0 0.0
      %365 = vmatpush1.msra.mxu0 0.0
      %366 = vmatprep.subr.mxu0 0.0
      %367 = vmatpush1.msra.mxu0 0.0
      %368 = vmatprep.subr.mxu0 0.0
      %369 = vmatpush1.msra.mxu0 0.0
      %370 = vmatprep.subr.mxu0 0.0
      %371 = vmatpush1.msra.mxu0 0.0
      %372 = vmatprep.subr.mxu0 0.0
      %373 = vmatpush1.msra.mxu0 0.0
      %374 = vmatprep.subr.mxu0 0.0
      %375 = vmatpush1.msra.mxu0 0.0
      %376 = vmatprep.subr.mxu0 0.0
      %377 = vmatpush1.msra.mxu0 0.0
      %378 = vmatprep.subr.mxu0 0.0
      %379 = vmatpush1.msra.mxu0 0.0
      %380 = vmatprep.subr.mxu0 0.0
      %381 = vmatpush1.msra.mxu0 0.0
      %382 = vmatprep.subr.mxu0 0.0
      %383 = vmatpush1.msra.mxu0 0.0
      %384 = vmatprep.subr.mxu0 0.0
      %385 = vmatpush1.msra.mxu0 0.0
      %386 = vmatprep.subr.mxu0 0.0
      %387 = vmatpush1.msra.mxu0 0.0
      %388 = vmatprep.subr.mxu0 0.0
      %389 = vmatpush1.msra.mxu0 0.0
      %390 = vmatprep.subr.mxu0 0.0
      %391 = vmatpush1.msra.mxu0 0.0
      %392 = vmatprep.mubr.f32.mxu0 0.0
      %393 = vmatmul.mubr.f32.gmra.mrb[0].mxu0 %v301
      %v394 = vpop.f32.mrb[0].mxu0
      %v395 = vadd.f32 %v297, %v394
      %v396 = vpop.f32.mrb[0].mxu0
      %397 = vmatprep.mubr.f32.mxu0 0.0
      %398 = vmatmul.mubr.f32.gmra.mrb[0].mxu0 %v304
      %v399 = vpop.f32.mrb[0].mxu0
      %v400 = vadd.f32 %v297, %v399
      %v401 = vpop.f32.mrb[0].mxu0
      %402 = vmatprep.mubr.f32.mxu0 0.0
      %403 = vmatmul.mubr.f32.gmra.mrb[0].mxu0 %v307
      %v404 = vpop.f32.mrb[0].mxu0
      %v405 = vadd.f32 %v297, %v404
      %v406 = vpop.f32.mrb[0].mxu0
      %407 = vmatprep.mubr.f32.mxu0 0.0
      %408 = vmatmul.mubr.f32.gmra.mrb[0].mxu0 %v310
      %v409 = vpop.f32.mrb[0].mxu0
      %v410 = vadd.f32 %v297, %v409
      %v411 = vpop.f32.mrb[0].mxu0
      %412 = vmatprep.mubr.f32.mxu0 0.0
      %413 = vmatmul.mubr.f32.gmra.mrb[0].mxu0 %v313
      %v414 = vpop.f32.mrb[0].mxu0
      %v415 = vadd.f32 %v297, %v414
      %v416 = vpop.f32.mrb[0].mxu0
      %417 = vmatprep.mubr.f32.mxu0 0.0
      %418 = vmatmul.mubr.f32.gmra.mrb[0].mxu0 %v316
      %v419 = vpop.f32.mrb[0].mxu0
      %v420 = vadd.f32 %v297, %v419
      %v421 = vpop.f32.mrb[0].mxu0
      %422 = vmatprep.mubr.f32.mxu0 0.0
      %423 = vmatmul.mubr.f32.gmra.mrb[0].mxu0 %v319
      %v424 = vpop.f32.mrb[0].mxu0
      %v425 = vadd.f32 %v297, %v424
      %v426 = vpop.f32.mrb[0].mxu0
      %427 = vmatprep.mubr.f32.mxu0 0.0
      %428 = vmatmul.mubr.f32.gmra.mrb[0].mxu0 %v322
      %v429 = vpop.f32.mrb[0].mxu0
      %v430 = vadd.f32 %v297, %v429
      %v431 = vpop.f32.mrb[0].mxu0
      %432 = vdwg.mxu0
      %vm433 = vcmp.ge.f32.partialorder %v395, 0.0
      %vm434 = vcmp.ge.f32.partialorder %v400, 0.0
      %vm435 = vcmp.ge.f32.partialorder %v405, 0.0
      %vm436 = vcmp.ge.f32.partialorder %v410, 0.0
      %vm437 = vcmp.ge.f32.partialorder %v415, 0.0
      %vm438 = vcmp.ge.f32.partialorder %v420, 0.0
      %vm439 = vcmp.ge.f32.partialorder %v425, 0.0
      %vm440 = vcmp.ge.f32.partialorder %v430, 0.0
      %v441 = vmul.f32 %v395, 0.1
      %v442 = vmul.f32 %v400, 0.1
      %v443 = vmul.f32 %v405, 0.1
      %v444 = vmul.f32 %v410, 0.1
      %v445 = vmul.f32 %v415, 0.1
      %v446 = vmul.f32 %v420, 0.1
      %v447 = vmul.f32 %v425, 0.1
      %v448 = vmul.f32 %v430, 0.1
      %v449 = vsel %vm433, %v395, %v441
      %v450 = vsel %vm434, %v400, %v442
      %v451 = vsel %vm435, %v405, %v443
      %v452 = vsel %vm436, %v410, %v444
      %v453 = vsel %vm437, %v415, %v445
      %v454 = vsel %vm438, %v420, %v446
      %v455 = vsel %vm439, %v425, %v447
      %v456 = vsel %vm440, %v430, %v448
      %v457 = vld [vmem:[%s3] sm:$0xff]
      %v458 = vld [vmem:[%s3 + $0x8] sm:$0xff]
      %v459 = vld [vmem:[%s3 + $0x10] sm:$0xff]
      %v460 = vld [vmem:[%s3 + $0x18] sm:$0xff]
      %v461 = vld [vmem:[%s3 + $0x20] sm:$0xff]
      %v462 = vld [vmem:[%s3 + $0x28] sm:$0xff]
      %v463 = vld [vmem:[%s3 + $0x30] sm:$0xff]
      %v464 = vld [vmem:[%s3 + $0x38] sm:$0xff]
      %v465 = vld [vmem:[%s3 + $0x40] sm:$0xff]
      %v466 = vld [vmem:[%s3 + $0x48] sm:$0xff]
      %v467 = vld [vmem:[%s3 + $0x50] sm:$0xff]
      %v468 = vld [vmem:[%s3 + $0x58] sm:$0xff]
      %v469 = vld [vmem:[%s3 + $0x60] sm:$0xff]
      %v470 = vld [vmem:[%s3 + $0x68] sm:$0xff]
      %v471 = vld [vmem:[%s3 + $0x70] sm:$0xff]
      %v472 = vld [vmem:[%s3 + $0x78] sm:$0xff]
      %v473 = vld [vmem:[%s4] sm:$0x1]
      %v475 = vlaneseq
      %v476 = vshrl.u32 %v475, 7
      %v477 = vsub.s32 0, %v476
      %v478 = vrot.slane %v473, %v477
      %480 = vmatprep.subr.mxu0 0.0
      %481 = vmatpush1.msra.mxu0 %v457
      %482 = vmatprep.subr.mxu0 0.0
      %483 = vmatpush1.msra.mxu0 %v458
      %484 = vmatprep.subr.mxu0 0.0
      %485 = vmatpush1.msra.mxu0 %v459
      %486 = vmatprep.subr.mxu0 0.0
      %487 = vmatpush1.msra.mxu0 %v460
      %488 = vmatprep.subr.mxu0 0.0
      %489 = vmatpush1.msra.mxu0 %v461
      %490 = vmatprep.subr.mxu0 0.0
      %491 = vmatpush1.msra.mxu0 %v462
      %492 = vmatprep.subr.mxu0 0.0
      %493 = vmatpush1.msra.mxu0 %v463
      %494 = vmatprep.subr.mxu0 0.0
      %495 = vmatpush1.msra.mxu0 %v464
      %496 = vmatprep.subr.mxu0 0.0
      %497 = vmatpush1.msra.mxu0 %v465
      %498 = vmatprep.subr.mxu0 0.0
      %499 = vmatpush1.msra.mxu0 %v466
      %500 = vmatprep.subr.mxu0 0.0
      %501 = vmatpush1.msra.mxu0 %v467
      %502 = vmatprep.subr.mxu0 0.0
      %503 = vmatpush1.msra.mxu0 %v468
      %504 = vmatprep.subr.mxu0 0.0
      %505 = vmatpush1.msra.mxu0 %v469
      %506 = vmatprep.subr.mxu0 0.0
      %507 = vmatpush1.msra.mxu0 %v470
      %508 = vmatprep.subr.mxu0 0.0
      %509 = vmatpush1.msra.mxu0 %v471
      %510 = vmatprep.subr.mxu0 0.0
      %511 = vmatpush1.msra.mxu0 %v472
      %512 = vmatprep.subr.mxu0 0.0
      %513 = vmatpush1.msra.mxu0 0.0
      %514 = vmatprep.subr.mxu0 0.0
      %515 = vmatpush1.msra.mxu0 0.0
      %516 = vmatprep.subr.mxu0 0.0
      %517 = vmatpush1.msra.mxu0 0.0
      %518 = vmatprep.subr.mxu0 0.0
      %519 = vmatpush1.msra.mxu0 0.0
      %520 = vmatprep.subr.mxu0 0.0
      %521 = vmatpush1.msra.mxu0 0.0
      %522 = vmatprep.subr.mxu0 0.0
      %523 = vmatpush1.msra.mxu0 0.0
      %524 = vmatprep.subr.mxu0 0.0
      %525 = vmatpush1.msra.mxu0 0.0
      %526 = vmatprep.subr.mxu0 0.0
      %527 = vmatpush1.msra.mxu0 0.0
      %528 = vmatprep.subr.mxu0 0.0
      %529 = vmatpush1.msra.mxu0 0.0
      %530 = vmatprep.subr.mxu0 0.0
      %531 = vmatpush1.msra.mxu0 0.0
      %532 = vmatprep.subr.mxu0 0.0
      %533 = vmatpush1.msra.mxu0 0.0
      %534 = vmatprep.subr.mxu0 0.0
      %535 = vmatpush1.msra.mxu0 0.0
      %536 = vmatprep.subr.mxu0 0.0
      %537 = vmatpush1.msra.mxu0 0.0
      %538 = vmatprep.subr.mxu0 0.0
      %539 = vmatpush1.msra.mxu0 0.0
      %540 = vmatprep.subr.mxu0 0.0
      %541 = vmatpush1.msra.mxu0 0.0
      %542 = vmatprep.subr.mxu0 0.0
      %543 = vmatpush1.msra.mxu0 0.0
      %544 = vmatprep.mubr.f32.mxu0 0.0
      %545 = vmatmul.mubr.f32.gmra.mrb[0].mxu0 %v449
      %v546 = vpop.f32.mrb[0].mxu0
      %v547 = vadd.f32 %v478, %v546
      %v548 = vpop.f32.mrb[0].mxu0
      %549 = vmatprep.mubr.f32.mxu0 0.0
      %550 = vmatmul.mubr.f32.gmra.mrb[0].mxu0 %v450
      %v551 = vpop.f32.mrb[0].mxu0
      %v552 = vadd.f32 %v478, %v551
      %v553 = vpop.f32.mrb[0].mxu0
      %554 = vmatprep.mubr.f32.mxu0 0.0
      %555 = vmatmul.mubr.f32.gmra.mrb[0].mxu0 %v451
      %v556 = vpop.f32.mrb[0].mxu0
      %v557 = vadd.f32 %v478, %v556
      %v558 = vpop.f32.mrb[0].mxu0
      %559 = vmatprep.mubr.f32.mxu0 0.0
      %560 = vmatmul.mubr.f32.gmra.mrb[0].mxu0 %v452
      %v561 = vpop.f32.mrb[0].mxu0
      %v562 = vadd.f32 %v478, %v561
      %v563 = vpop.f32.mrb[0].mxu0
      %564 = vmatprep.mubr.f32.mxu0 0.0
      %565 = vmatmul.mubr.f32.gmra.mrb[0].mxu0 %v453
      %v566 = vpop.f32.mrb[0].mxu0
      %v567 = vadd.f32 %v478, %v566
      %v568 = vpop.f32.mrb[0].mxu0
      %569 = vmatprep.mubr.f32.mxu0 0.0
      %570 = vmatmul.mubr.f32.gmra.mrb[0].mxu0 %v454
      %v571 = vpop.f32.mrb[0].mxu0
      %v572 = vadd.f32 %v478, %v571
      %v573 = vpop.f32.mrb[0].mxu0
      %574 = vmatprep.mubr.f32.mxu0 0.0
      %575 = vmatmul.mubr.f32.gmra.mrb[0].mxu0 %v455
      %v576 = vpop.f32.mrb[0].mxu0
      %v577 = vadd.f32 %v478, %v576
      %v578 = vpop.f32.mrb[0].mxu0
      %579 = vmatprep.mubr.f32.mxu0 0.0
      %580 = vmatmul.mubr.f32.gmra.mrb[0].mxu0 %v456
      %v581 = vpop.f32.mrb[0].mxu0
      %v582 = vadd.f32 %v478, %v581
      %v583 = vpop.f32.mrb[0].mxu0
      %584 = vdwg.mxu0
      %vm585 = vcmp.ge.f32.partialorder %v547, 0.0
      %vm586 = vcmp.ge.f32.partialorder %v552, 0.0
      %vm587 = vcmp.ge.f32.partialorder %v557, 0.0
      %vm588 = vcmp.ge.f32.partialorder %v562, 0.0
      %vm589 = vcmp.ge.f32.partialorder %v567, 0.0
      %vm590 = vcmp.ge.f32.partialorder %v572, 0.0
      %vm591 = vcmp.ge.f32.partialorder %v577, 0.0
      %vm592 = vcmp.ge.f32.partialorder %v582, 0.0
      %v593 = vmul.f32 %v547, 0.1
      %v594 = vmul.f32 %v552, 0.1
      %v595 = vmul.f32 %v557, 0.1
      %v596 = vmul.f32 %v562, 0.1
      %v597 = vmul.f32 %v567, 0.1
      %v598 = vmul.f32 %v572, 0.1
      %v599 = vmul.f32 %v577, 0.1
      %v600 = vmul.f32 %v582, 0.1
      %v601 = vsel %vm585, %v547, %v593
      %v602 = vsel %vm586, %v552, %v594
      %v603 = vsel %vm587, %v557, %v595
      %v604 = vsel %vm588, %v562, %v596
      %v605 = vsel %vm589, %v567, %v597
      %v606 = vsel %vm590, %v572, %v598
      %v607 = vsel %vm591, %v577, %v599
      %v608 = vsel %vm592, %v582, %v600
      %v609 = vld [vmem:[%s5] sm:$0xff]
      %v610 = vld [vmem:[%s5 + $0x8] sm:$0xff]
      %v611 = vld [vmem:[%s5 + $0x10] sm:$0xff]
      %v612 = vld [vmem:[%s5 + $0x18] sm:$0xff]
      %v613 = vld [vmem:[%s5 + $0x20] sm:$0xff]
      %v614 = vld [vmem:[%s5 + $0x28] sm:$0xff]
      %v615 = vld [vmem:[%s5 + $0x30] sm:$0xff]
      %v616 = vld [vmem:[%s5 + $0x38] sm:$0xff]
      %v617 = vld [vmem:[%s5 + $0x40] sm:$0xff]
      %v618 = vld [vmem:[%s5 + $0x48] sm:$0xff]
      %v619 = vld [vmem:[%s5 + $0x50] sm:$0xff]
      %v620 = vld [vmem:[%s5 + $0x58] sm:$0xff]
      %v621 = vld [vmem:[%s5 + $0x60] sm:$0xff]
      %v622 = vld [vmem:[%s5 + $0x68] sm:$0xff]
      %v623 = vld [vmem:[%s5 + $0x70] sm:$0xff]
      %v624 = vld [vmem:[%s5 + $0x78] sm:$0xff]
      %v625 = vld [vmem:[%s6] sm:$0x1]
      %v627 = vlaneseq
      %v628 = vshrl.u32 %v627, 7
      %v629 = vsub.s32 0, %v628
      %v630 = vrot.slane %v625, %v629
      %632 = vmatprep.subr.mxu0 0.0
      %633 = vmatpush1.msra.mxu0 %v609
      %634 = vmatprep.subr.mxu0 0.0
      %635 = vmatpush1.msra.mxu0 %v610
      %636 = vmatprep.subr.mxu0 0.0
      %637 = vmatpush1.msra.mxu0 %v611
      %638 = vmatprep.subr.mxu0 0.0
      %639 = vmatpush1.msra.mxu0 %v612
      %640 = vmatprep.subr.mxu0 0.0
      %641 = vmatpush1.msra.mxu0 %v613
      %642 = vmatprep.subr.mxu0 0.0
      %643 = vmatpush1.msra.mxu0 %v614
      %644 = vmatprep.subr.mxu0 0.0
      %645 = vmatpush1.msra.mxu0 %v615
      %646 = vmatprep.subr.mxu0 0.0
      %647 = vmatpush1.msra.mxu0 %v616
      %648 = vmatprep.subr.mxu0 0.0
      %649 = vmatpush1.msra.mxu0 %v617
      %650 = vmatprep.subr.mxu0 0.0
      %651 = vmatpush1.msra.mxu0 %v618
      %652 = vmatprep.subr.mxu0 0.0
      %653 = vmatpush1.msra.mxu0 %v619
      %654 = vmatprep.subr.mxu0 0.0
      %655 = vmatpush1.msra.mxu0 %v620
      %656 = vmatprep.subr.mxu0 0.0
      %657 = vmatpush1.msra.mxu0 %v621
      %658 = vmatprep.subr.mxu0 0.0
      %659 = vmatpush1.msra.mxu0 %v622
      %660 = vmatprep.subr.mxu0 0.0
      %661 = vmatpush1.msra.mxu0 %v623
      %662 = vmatprep.subr.mxu0 0.0
      %663 = vmatpush1.msra.mxu0 %v624
      %664 = vmatprep.subr.mxu0 0.0
      %665 = vmatpush1.msra.mxu0 0.0
      %666 = vmatprep.subr.mxu0 0.0
      %667 = vmatpush1.msra.mxu0 0.0
      %668 = vmatprep.subr.mxu0 0.0
      %669 = vmatpush1.msra.mxu0 0.0
      %670 = vmatprep.subr.mxu0 0.0
      %671 = vmatpush1.msra.mxu0 0.0
      %672 = vmatprep.subr.mxu0 0.0
      %673 = vmatpush1.msra.mxu0 0.0
      %674 = vmatprep.subr.mxu0 0.0
      %675 = vmatpush1.msra.mxu0 0.0
      %676 = vmatprep.subr.mxu0 0.0
      %677 = vmatpush1.msra.mxu0 0.0
      %678 = vmatprep.subr.mxu0 0.0
      %679 = vmatpush1.msra.mxu0 0.0
      %680 = vmatprep.subr.mxu0 0.0
      %681 = vmatpush1.msra.mxu0 0.0
      %682 = vmatprep.subr.mxu0 0.0
      %683 = vmatpush1.msra.mxu0 0.0
      %684 = vmatprep.subr.mxu0 0.0
      %685 = vmatpush1.msra.mxu0 0.0
      %686 = vmatprep.subr.mxu0 0.0
      %687 = vmatpush1.msra.mxu0 0.0
      %688 = vmatprep.subr.mxu0 0.0
      %689 = vmatpush1.msra.mxu0 0.0
      %690 = vmatprep.subr.mxu0 0.0
      %691 = vmatpush1.msra.mxu0 0.0
      %692 = vmatprep.subr.mxu0 0.0
      %693 = vmatpush1.msra.mxu0 0.0
      %694 = vmatprep.subr.mxu0 0.0
      %695 = vmatpush1.msra.mxu0 0.0
      %696 = vmatprep.mubr.f32.mxu0 0.0
      %697 = vmatmul.mubr.f32.gmra.mrb[0].mxu0 %v601
      %v698 = vpop.f32.mrb[0].mxu0
      %v699 = vadd.f32 %v630, %v698
      %v700 = vpop.f32.mrb[0].mxu0
      %701 = vmatprep.mubr.f32.mxu0 0.0
      %702 = vmatmul.mubr.f32.gmra.mrb[0].mxu0 %v602
      %v703 = vpop.f32.mrb[0].mxu0
      %v704 = vadd.f32 %v630, %v703
      %v705 = vpop.f32.mrb[0].mxu0
      %706 = vmatprep.mubr.f32.mxu0 0.0
      %707 = vmatmul.mubr.f32.gmra.mrb[0].mxu0 %v603
      %v708 = vpop.f32.mrb[0].mxu0
      %v709 = vadd.f32 %v630, %v708
      %v710 = vpop.f32.mrb[0].mxu0
      %711 = vmatprep.mubr.f32.mxu0 0.0
      %712 = vmatmul.mubr.f32.gmra.mrb[0].mxu0 %v604
      %v713 = vpop.f32.mrb[0].mxu0
      %v714 = vadd.f32 %v630, %v713
      %v715 = vpop.f32.mrb[0].mxu0
      %716 = vmatprep.mubr.f32.mxu0 0.0
      %717 = vmatmul.mubr.f32.gmra.mrb[0].mxu0 %v605
      %v718 = vpop.f32.mrb[0].mxu0
      %v719 = vadd.f32 %v630, %v718
      %v720 = vpop.f32.mrb[0].mxu0
      %721 = vmatprep.mubr.f32.mxu0 0.0
      %722 = vmatmul.mubr.f32.gmra.mrb[0].mxu0 %v606
      %v723 = vpop.f32.mrb[0].mxu0
      %v724 = vadd.f32 %v630, %v723
      %v725 = vpop.f32.mrb[0].mxu0
      %726 = vmatprep.mubr.f32.mxu0 0.0
      %727 = vmatmul.mubr.f32.gmra.mrb[0].mxu0 %v607
      %v728 = vpop.f32.mrb[0].mxu0
      %v729 = vadd.f32 %v630, %v728
      %v730 = vpop.f32.mrb[0].mxu0
      %731 = vmatprep.mubr.f32.mxu0 0.0
      %732 = vmatmul.mubr.f32.gmra.mrb[0].mxu0 %v608
      %v733 = vpop.f32.mrb[0].mxu0
      %v734 = vadd.f32 %v630, %v733
      %v735 = vpop.f32.mrb[0].mxu0
      %736 = vdwg.mxu0
      %737 = vst.msk [vmem:[%s280] sm:$0xff] %vm299, %v699
      %738 = vst.msk [vmem:[%s280 + $0x8] sm:$0xff] %vm299, %v704
      %739 = vst.msk [vmem:[%s280 + $0x10] sm:$0xff] %vm299, %v709
      %740 = vst.msk [vmem:[%s280 + $0x18] sm:$0xff] %vm299, %v714
      %741 = vst.msk [vmem:[%s280 + $0x20] sm:$0xff] %vm299, %v719
      %742 = vst.msk [vmem:[%s280 + $0x28] sm:$0xff] %vm299, %v724
      %743 = vst.msk [vmem:[%s280 + $0x30] sm:$0xff] %vm299, %v729
      %744 = vst.msk [vmem:[%s280 + $0x38] sm:$0xff] %vm299, %v734
      %s745 = smul.u32 8, %s18
      %p746 = scmp.lt.s32.totalorder %s745, 31
      %s747 = scalar_select %p746, %s745, 31
      %s748 = smul.addr %s747, 8
      %s749 = scalar_lea.vmem %s7, %s748
      // Predicated region
      $region49: #{tpu_custom_call.1} parent=47 // pred_check
        %p750 = pneg %p188
      $region50: #{tpu_custom_call.1} parent=47 // pred_check_branch
        %752 = sbr.rel (%p750) target = $region52
      $region51: #{tpu_custom_call.1} parent=47 // pred_region
        %s753 = smul.u32 8, %s18
      $region52: #{tpu_custom_call.1} parent=47 // pred_fallthru
        _
    $region48: #{tpu_custom_call.1} parent=5 // pred_fallthru
      _
    %p754 = scmp.le.s32.totalorder 2, %s13
    // Predicated region
    $region53: #{tpu_custom_call.1} parent=5 // pred_check
      %p755 = pneg %p754
    $region54: #{tpu_custom_call.1} parent=5 // pred_check_branch
      %757 = sbr.rel (%p755) target = $region56
    $region55: #{tpu_custom_call.1} parent=5 // pred_region
      %s758 = ssub.s32 %s13, 2
      // Predicated region
      $region57: #{tpu_custom_call.1} parent=55 // pred_check
        %p759 = pneg %p194
      $region58: #{tpu_custom_call.1} parent=55 // pred_check_branch
        %761 = sbr.rel (%p759) target = $region60
      $region59: #{tpu_custom_call.1} parent=55 // pred_region
        %s762 = smul.u32 8, %s19
        %p763 = scmp.lt.s32.totalorder %s762, 31
        %s764 = scalar_select %p763, %s762, 31
        %s765 = smul.addr %s764, 8
        %s766 = scalar_lea.vmem %s7, %s765
      $region60: #{tpu_custom_call.1} parent=55 // pred_fallthru
        _
    $region56: #{tpu_custom_call.1} parent=5 // pred_fallthru
      _
  $region6: #{tpu_custom_call.1} parent=0 // loop_footer
    %s17 = sadd.s32 1, %s13
  $region7: #{tpu_custom_call.1} parent=0 // loop_footer_branch
    %12 = sbr.rel target = $region3
  $region8: #{tpu_custom_call.1} parent=0 // loop_exit
    _

</llo_original>
